<compile_context>
chip_gen: v7x
topology: tpu7x:2x2x1
jax: 0.10.0
libtpu: 0.0.40
codegen_flags: <defaults>
</compile_context>

<pallas_src>
import jax
import jax.numpy as jnp
from jax.experimental import pallas as pl
from jax.experimental.pallas import tpu as pltpu


def _discriminator_kernel(wc_ref, hpl_ref, hmi_ref, sc1_ref, sc2_ref):
    hpl = hpl_ref[...]                                    # (B, TN, n_h)
    hmi = hmi_ref[...]                                    # (B, TN, n_h)
    # Broadcast Wc once and reuse it for both products (JAX does not CSE
    # broadcast_in_dim); cast to the streaming dtype before broadcasting.
    wc_b = jnp.broadcast_to(
        wc_ref[...].astype(hpl.dtype)[:, None, :], hpl.shape)
    # Multiply in the streaming dtype, accumulate the lane-reduce in f32.
    sc1 = jnp.sum(hpl * wc_b, axis=-1, dtype=jnp.float32)   # (B, TN)
    sc2 = jnp.sum(hmi * wc_b, axis=-1, dtype=jnp.float32)   # (B, TN)
    sc1_ref[...] = sc1.astype(sc1_ref.dtype)
    sc2_ref[...] = sc2.astype(sc2_ref.dtype)


def _round_up(x, m):
    return ((x + m - 1) // m) * m


def discriminator_forward(c, h_pl, h_mi, weight, bias,
                          s_bias1=None, s_bias2=None, *, tile_n=512):
    """Pallas-backed forward pass matching Discriminator.forward."""
    B, N, n_h = h_pl.shape
    assert c.shape == (B, n_h)
    assert h_mi.shape == (B, N, n_h)

    # nn.Bilinear weight: (out_features=1, n_h, n_h).
    if weight.ndim == 3:
        assert weight.shape == (1, n_h, n_h), "expected Bilinear out_features==1"
        w2d = weight[0]
    else:
        w2d = weight
    assert w2d.shape == (n_h, n_h)

    # Hoist the N-invariant half of the bilinear form out of the kernel:
    #   Wc[b, i] = sum_j W[i, j] * c[b, j]
    wc = jnp.dot(c.astype(jnp.float32), w2d.astype(jnp.float32).T,
                 preferred_element_type=jnp.float32)        # (B, n_h) f32

    # Tile the node axis. TN multiple of 128 -> lane-dense output stores,
    # sublane-aligned h tiles. Pad N up to a multiple of TN (zeros -> pad
    # rows produce garbage-free values that we slice off below).
    tn = _round_up(min(tile_n, _round_up(N, 128)), 128)
    n_pad = _round_up(N, tn)
    if n_pad != N:
        pad = ((0, 0), (0, n_pad - N), (0, 0))
        h_pl_p = jnp.pad(h_pl, pad)
        h_mi_p = jnp.pad(h_mi, pad)
    else:
        h_pl_p, h_mi_p = h_pl, h_mi

    grid = (n_pad // tn,)
    sc1, sc2 = pl.pallas_call(
        _discriminator_kernel,
        out_shape=(jax.ShapeDtypeStruct((B, n_pad), jnp.float32),
                   jax.ShapeDtypeStruct((B, n_pad), jnp.float32)),
        grid_spec=pltpu.PrefetchScalarGridSpec(
            num_scalar_prefetch=0,
            grid=grid,
            in_specs=[
                pl.BlockSpec((B, n_h),     lambda i: (0, 0)),     # Wc (resident)
                pl.BlockSpec((B, tn, n_h), lambda i: (0, i, 0)),  # h_pl tile
                pl.BlockSpec((B, tn, n_h), lambda i: (0, i, 0)),  # h_mi tile
            ],
            out_specs=[
                pl.BlockSpec((B, tn), lambda i: (0, i)),
                pl.BlockSpec((B, tn), lambda i: (0, i)),
            ],
        ),
        compiler_params=pltpu.CompilerParams(
            # Independent N tiles: shard the grid across both TensorCores on
            # v7x (no-op on single-TC v5e/v6e).
            dimension_semantics=("parallel",),
            # Per-step footprint (2 inputs x 2 buffers x B*tn*n_h) stays well
            # under the scoped-VMEM default for tile_n<=512; for tile_n of
            # 1024-2048 on v6e, additionally pass e.g.
            #   vmem_limit_bytes=64 * 1024 * 1024,
        ),
    )(wc, h_pl_p, h_mi_p)

    b0 = bias.reshape(()).astype(jnp.float32)
    sc1 = sc1[:, :N] + b0
    sc2 = sc2[:, :N] + b0
    if s_bias1 is not None:
        sc1 = sc1 + s_bias1
    if s_bias2 is not None:
        sc2 = sc2 + s_bias2
    return jnp.concatenate([sc1, sc2], axis=1)              # (B, 2N) f32


def init_discriminator_params(key, n_h):
    """Deterministic xavier_uniform_ weight, zero bias (as in weights_init)."""
    bound = (6.0 / (n_h + n_h)) ** 0.5
    weight = jax.random.uniform(key, (1, n_h, n_h), jnp.float32,
                                minval=-bound, maxval=bound)
    bias = jnp.zeros((1,), jnp.float32)
    return weight, bias


def _reference_forward(c, h_pl, h_mi, weight, bias):
    # Pure-JAX reference of the torch.nn.Bilinear-based forward.
    W = weight[0]
    sc1 = jnp.einsum('bni,ij,bj->bn', h_pl, W, c) + bias[0]
    sc2 = jnp.einsum('bni,ij,bj->bn', h_mi, W, c) + bias[0]
    return jnp.concatenate([sc1, sc2], axis=1)


if __name__ == "__main__":
    key = jax.random.PRNGKey(0)
    k_w, k_c, k_pl, k_mi = jax.random.split(key, 4)

    B, N, n_h = 2, 8, 32
    weight, bias = init_discriminator_params(k_w, n_h)

    c = jax.random.normal(k_c, (B, n_h), jnp.float32)
    h_pl = jax.random.normal(k_pl, (B, N, n_h), jnp.float32)
    h_mi = jax.random.normal(k_mi, (B, N, n_h), jnp.float32)

    logits = discriminator_forward(c, h_pl, h_mi, weight, bias)
    jax.block_until_ready(logits)

    ref = _reference_forward(c, h_pl, h_mi, weight, bias)
    assert logits.shape == (B, 2 * N)
    assert jnp.allclose(logits, ref, atol=1e-4, rtol=1e-4)

    print("KERNEL_OK")
</pallas_src>

<mosaic_0001>
module attributes {stable_mosaic.version = 11 : i64} {
  func.func @_discriminator_kernel(%arg0: i32, %arg1: memref<2x32xf32, #tpu.memory_space<vmem>>, %arg2: memref<2x128x32xf32, #tpu.memory_space<vmem>>, %arg3: memref<2x128x32xf32, #tpu.memory_space<vmem>>, %arg4: memref<2x128xf32, #tpu.memory_space<vmem>>, %arg5: memref<2x128xf32, #tpu.memory_space<vmem>>) attributes {dimension_semantics = [#tpu.dimension_semantics<parallel>], iteration_bounds = array<i64: 1>, scalar_prefetch = 0 : i64, scratch_operands = 0 : i64, tpu.core_type = #tpu.core_type<tc>, window_params = [{pipeline_mode = #tpu.pipeline_mode<synchronous>, transform_indices = @transform_0, window_bounds = array<i64: 2, 32>}, {transform_indices = @transform_1, window_bounds = array<i64: 2, 128, 32>}, {transform_indices = @transform_2, window_bounds = array<i64: 2, 128, 32>}, {transform_indices = @transform_3, window_bounds = array<i64: 2, 128>}, {transform_indices = @transform_4, window_bounds = array<i64: 2, 128>}]} {
    %c0 = arith.constant 0 : index
    %c0_0 = arith.constant 0 : index
    %c0_1 = arith.constant 0 : index
    %0 = vector.load %arg2[%c0, %c0_0, %c0_1] : memref<2x128x32xf32, #tpu.memory_space<vmem>>, vector<2x128x32xf32>
    %c0_2 = arith.constant 0 : index
    %c0_3 = arith.constant 0 : index
    %c0_4 = arith.constant 0 : index
    %1 = vector.load %arg3[%c0_2, %c0_3, %c0_4] : memref<2x128x32xf32, #tpu.memory_space<vmem>>, vector<2x128x32xf32>
    %c0_5 = arith.constant 0 : index
    %c0_6 = arith.constant 0 : index
    %2 = vector.load %arg1[%c0_5, %c0_6] : memref<2x32xf32, #tpu.memory_space<vmem>>, vector<2x32xf32>
    %3 = vector.shape_cast %2 : vector<2x32xf32> to vector<2x1x32xf32>
    %4 = vector.shape_cast %3 : vector<2x1x32xf32> to vector<2x1x32xf32>
    %5 = vector.broadcast %4 : vector<2x1x32xf32> to vector<2x128x32xf32>
    %6 = arith.mulf %0, %5 : vector<2x128x32xf32>
    %cst = arith.constant dense<0.000000e+00> : vector<2x128xf32>
    %7 = vector.multi_reduction <add>, %6, %cst [2] : vector<2x128x32xf32> to vector<2x128xf32>
    %8 = arith.mulf %1, %5 : vector<2x128x32xf32>
    %cst_7 = arith.constant dense<0.000000e+00> : vector<2x128xf32>
    %9 = vector.multi_reduction <add>, %8, %cst_7 [2] : vector<2x128x32xf32> to vector<2x128xf32>
    %c0_8 = arith.constant 0 : index
    %c0_9 = arith.constant 0 : index
    %10 = vector.load %arg4[%c0_8, %c0_9] : memref<2x128xf32, #tpu.memory_space<vmem>>, vector<2x128xf32>
    tpu.vector_store %arg4[%c0_8, %c0_9], %7 {strides = array<i32>} : memref<2x128xf32, #tpu.memory_space<vmem>>, vector<2x128xf32>,
    %c0_10 = arith.constant 0 : index
    %c0_11 = arith.constant 0 : index
    %11 = vector.load %arg5[%c0_10, %c0_11] : memref<2x128xf32, #tpu.memory_space<vmem>>, vector<2x128xf32>
    tpu.vector_store %arg5[%c0_10, %c0_11], %9 {strides = array<i32>} : memref<2x128xf32, #tpu.memory_space<vmem>>, vector<2x128xf32>,
    return
  }
  func.func @transform_0(%arg0: i32) -> (i32, i32) {
    %c0_i32 = arith.constant 0 : i32
    %c0_i32_0 = arith.constant 0 : i32
    %c0_i32_1 = arith.constant 0 : i32
    return %c0_i32, %c0_i32_0 : i32, i32
  }
  func.func @transform_1(%arg0: i32) -> (i32, i32, i32) {
    %c0_i32 = arith.constant 0 : i32
    %c0_i32_0 = arith.constant 0 : i32
    %c0_i32_1 = arith.constant 0 : i32
    return %c0_i32, %arg0, %c0_i32_0 : i32, i32, i32
  }
  func.func @transform_2(%arg0: i32) -> (i32, i32, i32) {
    %c0_i32 = arith.constant 0 : i32
    %c0_i32_0 = arith.constant 0 : i32
    %c0_i32_1 = arith.constant 0 : i32
    return %c0_i32, %arg0, %c0_i32_0 : i32, i32, i32
  }
  func.func @transform_3(%arg0: i32) -> (i32, i32) {
    %c0_i32 = arith.constant 0 : i32
    %c0_i32_0 = arith.constant 0 : i32
    return %c0_i32, %arg0 : i32, i32
  }
  func.func @transform_4(%arg0: i32) -> (i32, i32) {
    %c0_i32 = arith.constant 0 : i32
    %c0_i32_0 = arith.constant 0 : i32
    return %c0_i32, %arg0 : i32, i32
  }
}

</mosaic_0001>

<llo_original>
// kernel: tpu_custom_call.1
$region0: #{tpu_custom_call.1}
  #allocation0 [shape = 'u32[]', space=smem, size = 0x4, offset = 0x4, fixed_abs, tag = 'smem constant byte address 0x4 - core index']
  #allocation1 [shape = 'u32[144,128]{1,0:T(1,128)}', space=vmem, size = 0x12000, scoped, tag = 'internal scratch']
  %s0 = inlined_call_operand.vmem [shape: f32[2,32], index: 0, kind: input, shape index: {}]
  %s1 = inlined_call_operand.vmem [shape: f32[2,128,32], index: 1, kind: input, shape index: {}]
  %s2 = inlined_call_operand.vmem [shape: f32[2,128,32], index: 2, kind: input, shape index: {}]
  %s3 = inlined_call_operand.hbm [shape: f32[2,128], index: 3, kind: output, shape index: {0}]
  %s4 = inlined_call_operand.hbm [shape: f32[2,128], index: 4, kind: output, shape index: {1}]
  %5 = xla_tuple %s3, %s4
  %s6 = sld [smem:[#allocation0]]
  $region30: #{tpu_custom_call.1} parent=0
    _
  %s8 = ssub.s32 1, %s6
  %s9 = scalar_select 0, %s8, %s6
  $region1: #{tpu_custom_call.1} parent=0
    #allocation2 [shape = 'u8[1024]{0}', space=vmem, size = 0x400, scoped, tag = 'output window, operand 0, single buffered']
    #allocation3 [shape = 's32[1]{0}', space=sflag, size = 0x4, scoped, tag = 'scoped memory for tpu_custom_call.1']
    #allocation4 [shape = 'u8[1024]{0}', space=vmem, size = 0x400, scoped, tag = 'output window, operand 1, single buffered']
    #allocation5 [shape = 's32[1]{0}', space=sflag, size = 0x4, scoped, tag = 'scoped memory for tpu_custom_call.1']
    %10 = vsyncpa [#allocation3], 0
    %11 = vsyncpa [#allocation5], 0
    // Predicated region
    $region2: #{tpu_custom_call.1} parent=1 // pred_check
      _
    $region3: #{tpu_custom_call.1} parent=1 // pred_check_branch
      %13 = sbr.rel (0) target = $region5
    $region4: #{tpu_custom_call.1} parent=1 // pred_region
      _
    $region5: #{tpu_custom_call.1} parent=1 // pred_fallthru
      _
    // Predicated region
    $region6: #{tpu_custom_call.1} parent=1 // pred_check
      _
    $region7: #{tpu_custom_call.1} parent=1 // pred_check_branch
      %15 = sbr.rel (0) target = $region9
    $region8: #{tpu_custom_call.1} parent=1 // pred_region
      _
    $region9: #{tpu_custom_call.1} parent=1 // pred_fallthru
      _
    // Predicated region
    $region10: #{tpu_custom_call.1} parent=1 // pred_check
      _
    $region11: #{tpu_custom_call.1} parent=1 // pred_check_branch
      %17 = sbr.rel (0) target = $region13
    $region12: #{tpu_custom_call.1} parent=1 // pred_region
      _
    $region13: #{tpu_custom_call.1} parent=1 // pred_fallthru
      _
    %v18 = vld [vmem:[%s1] sm:$0xff]
    %v19 = vld [vmem:[%s1 + $0x8] sm:$0xff]
    %v20 = vld [vmem:[%s1 + $0x10] sm:$0xff]
    %v21 = vld [vmem:[%s1 + $0x18] sm:$0xff]
    %v22 = vld [vmem:[%s1 + $0x20] sm:$0xff]
    %v23 = vld [vmem:[%s1 + $0x28] sm:$0xff]
    %v24 = vld [vmem:[%s1 + $0x30] sm:$0xff]
    %v25 = vld [vmem:[%s1 + $0x38] sm:$0xff]
    %v26 = vld [vmem:[%s1 + $0x40] sm:$0xff]
    %v27 = vld [vmem:[%s1 + $0x48] sm:$0xff]
    %v28 = vld [vmem:[%s1 + $0x50] sm:$0xff]
    %v29 = vld [vmem:[%s1 + $0x58] sm:$0xff]
    %v30 = vld [vmem:[%s1 + $0x60] sm:$0xff]
    %v31 = vld [vmem:[%s1 + $0x68] sm:$0xff]
    %v32 = vld [vmem:[%s1 + $0x70] sm:$0xff]
    %v33 = vld [vmem:[%s1 + $0x78] sm:$0xff]
    %v34 = vld [vmem:[%s1 + $0x80] sm:$0xff]
    %v35 = vld [vmem:[%s1 + $0x88] sm:$0xff]
    %v36 = vld [vmem:[%s1 + $0x90] sm:$0xff]
    %v37 = vld [vmem:[%s1 + $0x98] sm:$0xff]
    %v38 = vld [vmem:[%s1 + $0xa0] sm:$0xff]
    %v39 = vld [vmem:[%s1 + $0xa8] sm:$0xff]
    %v40 = vld [vmem:[%s1 + $0xb0] sm:$0xff]
    %v41 = vld [vmem:[%s1 + $0xb8] sm:$0xff]
    %v42 = vld [vmem:[%s1 + $0xc0] sm:$0xff]
    %v43 = vld [vmem:[%s1 + $0xc8] sm:$0xff]
    %v44 = vld [vmem:[%s1 + $0xd0] sm:$0xff]
    %v45 = vld [vmem:[%s1 + $0xd8] sm:$0xff]
    %v46 = vld [vmem:[%s1 + $0xe0] sm:$0xff]
    %v47 = vld [vmem:[%s1 + $0xe8] sm:$0xff]
    %v48 = vld [vmem:[%s1 + $0xf0] sm:$0xff]
    %v49 = vld [vmem:[%s1 + $0xf8] sm:$0xff]
    %v50 = vld [vmem:[%s2] sm:$0xff]
    %v51 = vld [vmem:[%s2 + $0x8] sm:$0xff]
    %v52 = vld [vmem:[%s2 + $0x10] sm:$0xff]
    %v53 = vld [vmem:[%s2 + $0x18] sm:$0xff]
    %v54 = vld [vmem:[%s2 + $0x20] sm:$0xff]
    %v55 = vld [vmem:[%s2 + $0x28] sm:$0xff]
    %v56 = vld [vmem:[%s2 + $0x30] sm:$0xff]
    %v57 = vld [vmem:[%s2 + $0x38] sm:$0xff]
    %v58 = vld [vmem:[%s2 + $0x40] sm:$0xff]
    %v59 = vld [vmem:[%s2 + $0x48] sm:$0xff]
    %v60 = vld [vmem:[%s2 + $0x50] sm:$0xff]
    %v61 = vld [vmem:[%s2 + $0x58] sm:$0xff]
    %v62 = vld [vmem:[%s2 + $0x60] sm:$0xff]
    %v63 = vld [vmem:[%s2 + $0x68] sm:$0xff]
    %v64 = vld [vmem:[%s2 + $0x70] sm:$0xff]
    %v65 = vld [vmem:[%s2 + $0x78] sm:$0xff]
    %v66 = vld [vmem:[%s2 + $0x80] sm:$0xff]
    %v67 = vld [vmem:[%s2 + $0x88] sm:$0xff]
    %v68 = vld [vmem:[%s2 + $0x90] sm:$0xff]
    %v69 = vld [vmem:[%s2 + $0x98] sm:$0xff]
    %v70 = vld [vmem:[%s2 + $0xa0] sm:$0xff]
    %v71 = vld [vmem:[%s2 + $0xa8] sm:$0xff]
    %v72 = vld [vmem:[%s2 + $0xb0] sm:$0xff]
    %v73 = vld [vmem:[%s2 + $0xb8] sm:$0xff]
    %v74 = vld [vmem:[%s2 + $0xc0] sm:$0xff]
    %v75 = vld [vmem:[%s2 + $0xc8] sm:$0xff]
    %v76 = vld [vmem:[%s2 + $0xd0] sm:$0xff]
    %v77 = vld [vmem:[%s2 + $0xd8] sm:$0xff]
    %v78 = vld [vmem:[%s2 + $0xe0] sm:$0xff]
    %v79 = vld [vmem:[%s2 + $0xe8] sm:$0xff]
    %v80 = vld [vmem:[%s2 + $0xf0] sm:$0xff]
    %v81 = vld [vmem:[%s2 + $0xf8] sm:$0xff]
    %v82 = vld [vmem:[%s0] sm:$0x3]
    %v85 = vunpack.c.l.s4 1966171168
    %v86 = vunpack.c.0.s8 %v85
    %v87 = vlaneseq
    %v88 = vshrl.u32 %v87, 7
    %v89 = vsub.s32 %v86, %v88
    %v90 = vrot.slane %v82, %v89
    %v91 = vcombine.high %v90, %v90
    %v93 = vunpack.c.l.s4 1966171168
    %v94 = vunpack.c.0.s8 %v93
    %v95 = vlaneseq
    %v96 = vshrl.u32 %v95, 7
    %v97 = vsub.s32 %v94, %v96
    %v98 = vrot.slane %v90, %v97
    %v100 = vunpack.c.l.s4 1966171168
    %v101 = vunpack.c.0.s8 %v100
    %v102 = vlaneseq
    %v103 = vshrl.u32 %v102, 7
    %v104 = vsub.s32 %v101, %v103
    %v105 = vrot.slane %v91, %v104
    %v106 = vlaneseq
    %v107 = vshrl.u32 %v106, 7
    %v108 = vsub.s32 0, %v107
    %v109 = vrot.slane %v98, %v108
    %v110 = vlaneseq
    %v111 = vshrl.u32 %v110, 7
    %v112 = vsub.s32 0, %v111
    %v113 = vrot.slane %v105, %v112
    %v116 = vmul.f32 %v18, %v109
    %v117 = vmul.f32 %v19, %v109
    %v118 = vmul.f32 %v20, %v109
    %v119 = vmul.f32 %v21, %v109
    %v120 = vmul.f32 %v22, %v109
    %v121 = vmul.f32 %v23, %v109
    %v122 = vmul.f32 %v24, %v109
    %v123 = vmul.f32 %v25, %v109
    %v124 = vmul.f32 %v26, %v109
    %v125 = vmul.f32 %v27, %v109
    %v126 = vmul.f32 %v28, %v109
    %v127 = vmul.f32 %v29, %v109
    %v128 = vmul.f32 %v30, %v109
    %v129 = vmul.f32 %v31, %v109
    %v130 = vmul.f32 %v32, %v109
    %v131 = vmul.f32 %v33, %v109
    %v132 = vmul.f32 %v34, %v113
    %v133 = vmul.f32 %v35, %v113
    %v134 = vmul.f32 %v36, %v113
    %v135 = vmul.f32 %v37, %v113
    %v136 = vmul.f32 %v38, %v113
    %v137 = vmul.f32 %v39, %v113
    %v138 = vmul.f32 %v40, %v113
    %v139 = vmul.f32 %v41, %v113
    %v140 = vmul.f32 %v42, %v113
    %v141 = vmul.f32 %v43, %v113
    %v142 = vmul.f32 %v44, %v113
    %v143 = vmul.f32 %v45, %v113
    %v144 = vmul.f32 %v46, %v113
    %v145 = vmul.f32 %v47, %v113
    %v146 = vmul.f32 %v48, %v113
    %v147 = vmul.f32 %v49, %v113
    %vm148 = vcmask 261120
    %v149 = vsel %vm148, %v116, 0.0
    %150 = vadd.xlane.f32.xlu0 %v149
    %v151 = vpop.xlane.xlu0 %150
    %v152 = vsel %vm148, %v117, 0.0
    %153 = vadd.xlane.f32.xlu0 %v152
    %v154 = vpop.xlane.xlu0 %153
    %v155 = vsel %vm148, %v118, 0.0
    %156 = vadd.xlane.f32.xlu0 %v155
    %v157 = vpop.xlane.xlu0 %156
    %v158 = vsel %vm148, %v119, 0.0
    %159 = vadd.xlane.f32.xlu0 %v158
    %v160 = vpop.xlane.xlu0 %159
    %v161 = vsel %vm148, %v120, 0.0
    %162 = vadd.xlane.f32.xlu0 %v161
    %v163 = vpop.xlane.xlu0 %162
    %v164 = vsel %vm148, %v121, 0.0
    %165 = vadd.xlane.f32.xlu0 %v164
    %v166 = vpop.xlane.xlu0 %165
    %v167 = vsel %vm148, %v122, 0.0
    %168 = vadd.xlane.f32.xlu0 %v167
    %v169 = vpop.xlane.xlu0 %168
    %v170 = vsel %vm148, %v123, 0.0
    %171 = vadd.xlane.f32.xlu0 %v170
    %v172 = vpop.xlane.xlu0 %171
    %v173 = vsel %vm148, %v124, 0.0
    %174 = vadd.xlane.f32.xlu0 %v173
    %v175 = vpop.xlane.xlu0 %174
    %v176 = vsel %vm148, %v125, 0.0
    %177 = vadd.xlane.f32.xlu0 %v176
    %v178 = vpop.xlane.xlu0 %177
    %v179 = vsel %vm148, %v126, 0.0
    %180 = vadd.xlane.f32.xlu0 %v179
    %v181 = vpop.xlane.xlu0 %180
    %v182 = vsel %vm148, %v127, 0.0
    %183 = vadd.xlane.f32.xlu0 %v182
    %v184 = vpop.xlane.xlu0 %183
    %v185 = vsel %vm148, %v128, 0.0
    %186 = vadd.xlane.f32.xlu0 %v185
    %v187 = vpop.xlane.xlu0 %186
    %v188 = vsel %vm148, %v129, 0.0
    %189 = vadd.xlane.f32.xlu0 %v188
    %v190 = vpop.xlane.xlu0 %189
    %v191 = vsel %vm148, %v130, 0.0
    %192 = vadd.xlane.f32.xlu0 %v191
    %v193 = vpop.xlane.xlu0 %192
    %v194 = vsel %vm148, %v131, 0.0
    %195 = vadd.xlane.f32.xlu0 %v194
    %v196 = vpop.xlane.xlu0 %195
    %v197 = vsel %vm148, %v132, 0.0
    %198 = vadd.xlane.f32.xlu0 %v197
    %v199 = vpop.xlane.xlu0 %198
    %v200 = vsel %vm148, %v133, 0.0
    %201 = vadd.xlane.f32.xlu0 %v200
    %v202 = vpop.xlane.xlu0 %201
    %v203 = vsel %vm148, %v134, 0.0
    %204 = vadd.xlane.f32.xlu0 %v203
    %v205 = vpop.xlane.xlu0 %204
    %v206 = vsel %vm148, %v135, 0.0
    %207 = vadd.xlane.f32.xlu0 %v206
    %v208 = vpop.xlane.xlu0 %207
    %v209 = vsel %vm148, %v136, 0.0
    %210 = vadd.xlane.f32.xlu0 %v209
    %v211 = vpop.xlane.xlu0 %210
    %v212 = vsel %vm148, %v137, 0.0
    %213 = vadd.xlane.f32.xlu0 %v212
    %v214 = vpop.xlane.xlu0 %213
    %v215 = vsel %vm148, %v138, 0.0
    %216 = vadd.xlane.f32.xlu0 %v215
    %v217 = vpop.xlane.xlu0 %216
    %v218 = vsel %vm148, %v139, 0.0
    %219 = vadd.xlane.f32.xlu0 %v218
    %v220 = vpop.xlane.xlu0 %219
    %v221 = vsel %vm148, %v140, 0.0
    %222 = vadd.xlane.f32.xlu0 %v221
    %v223 = vpop.xlane.xlu0 %222
    %v224 = vsel %vm148, %v141, 0.0
    %225 = vadd.xlane.f32.xlu0 %v224
    %v226 = vpop.xlane.xlu0 %225
    %v227 = vsel %vm148, %v142, 0.0
    %228 = vadd.xlane.f32.xlu0 %v227
    %v229 = vpop.xlane.xlu0 %228
    %v230 = vsel %vm148, %v143, 0.0
    %231 = vadd.xlane.f32.xlu0 %v230
    %v232 = vpop.xlane.xlu0 %231
    %v233 = vsel %vm148, %v144, 0.0
    %234 = vadd.xlane.f32.xlu0 %v233
    %v235 = vpop.xlane.xlu0 %234
    %v236 = vsel %vm148, %v145, 0.0
    %237 = vadd.xlane.f32.xlu0 %v236
    %v238 = vpop.xlane.xlu0 %237
    %v239 = vsel %vm148, %v146, 0.0
    %240 = vadd.xlane.f32.xlu0 %v239
    %v241 = vpop.xlane.xlu0 %240
    %v242 = vsel %vm148, %v147, 0.0
    %243 = vadd.xlane.f32.xlu0 %v242
    %v244 = vpop.xlane.xlu0 %243
    %v245 = vmul.f32 %v50, %v109
    %v246 = vmul.f32 %v51, %v109
    %v247 = vmul.f32 %v52, %v109
    %v248 = vmul.f32 %v53, %v109
    %v249 = vmul.f32 %v54, %v109
    %v250 = vmul.f32 %v55, %v109
    %v251 = vmul.f32 %v56, %v109
    %v252 = vmul.f32 %v57, %v109
    %v253 = vmul.f32 %v58, %v109
    %v254 = vmul.f32 %v59, %v109
    %v255 = vmul.f32 %v60, %v109
    %v256 = vmul.f32 %v61, %v109
    %v257 = vmul.f32 %v62, %v109
    %v258 = vmul.f32 %v63, %v109
    %v259 = vmul.f32 %v64, %v109
    %v260 = vmul.f32 %v65, %v109
    %v261 = vmul.f32 %v66, %v113
    %v262 = vmul.f32 %v67, %v113
    %v263 = vmul.f32 %v68, %v113
    %v264 = vmul.f32 %v69, %v113
    %v265 = vmul.f32 %v70, %v113
    %v266 = vmul.f32 %v71, %v113
    %v267 = vmul.f32 %v72, %v113
    %v268 = vmul.f32 %v73, %v113
    %v269 = vmul.f32 %v74, %v113
    %v270 = vmul.f32 %v75, %v113
    %v271 = vmul.f32 %v76, %v113
    %v272 = vmul.f32 %v77, %v113
    %v273 = vmul.f32 %v78, %v113
    %v274 = vmul.f32 %v79, %v113
    %v275 = vmul.f32 %v80, %v113
    %v276 = vmul.f32 %v81, %v113
    %v277 = vsel %vm148, %v245, 0.0
    %278 = vadd.xlane.f32.xlu0 %v277
    %v279 = vpop.xlane.xlu0 %278
    %v280 = vsel %vm148, %v246, 0.0
    %281 = vadd.xlane.f32.xlu0 %v280
    %v282 = vpop.xlane.xlu0 %281
    %v283 = vsel %vm148, %v247, 0.0
    %284 = vadd.xlane.f32.xlu0 %v283
    %v285 = vpop.xlane.xlu0 %284
    %v286 = vsel %vm148, %v248, 0.0
    %287 = vadd.xlane.f32.xlu0 %v286
    %v288 = vpop.xlane.xlu0 %287
    %v289 = vsel %vm148, %v249, 0.0
    %290 = vadd.xlane.f32.xlu0 %v289
    %v291 = vpop.xlane.xlu0 %290
    %v292 = vsel %vm148, %v250, 0.0
    %293 = vadd.xlane.f32.xlu0 %v292
    %v294 = vpop.xlane.xlu0 %293
    %v295 = vsel %vm148, %v251, 0.0
    %296 = vadd.xlane.f32.xlu0 %v295
    %v297 = vpop.xlane.xlu0 %296
    %v298 = vsel %vm148, %v252, 0.0
    %299 = vadd.xlane.f32.xlu0 %v298
    %v300 = vpop.xlane.xlu0 %299
    %v301 = vsel %vm148, %v253, 0.0
    %302 = vadd.xlane.f32.xlu0 %v301
    %v303 = vpop.xlane.xlu0 %302
    %v304 = vsel %vm148, %v254, 0.0
    %305 = vadd.xlane.f32.xlu0 %v304
    %v306 = vpop.xlane.xlu0 %305
    %v307 = vsel %vm148, %v255, 0.0
    %308 = vadd.xlane.f32.xlu0 %v307
    %v309 = vpop.xlane.xlu0 %308
    %v310 = vsel %vm148, %v256, 0.0
    %311 = vadd.xlane.f32.xlu0 %v310
    %v312 = vpop.xlane.xlu0 %311
    %v313 = vsel %vm148, %v257, 0.0
    %314 = vadd.xlane.f32.xlu0 %v313
    %v315 = vpop.xlane.xlu0 %314
    %v316 = vsel %vm148, %v258, 0.0
    %317 = vadd.xlane.f32.xlu0 %v316
    %v318 = vpop.xlane.xlu0 %317
    %v319 = vsel %vm148, %v259, 0.0
    %320 = vadd.xlane.f32.xlu0 %v319
    %v321 = vpop.xlane.xlu0 %320
    %v322 = vsel %vm148, %v260, 0.0
    %323 = vadd.xlane.f32.xlu0 %v322
    %v324 = vpop.xlane.xlu0 %323
    %v325 = vsel %vm148, %v261, 0.0
    %326 = vadd.xlane.f32.xlu0 %v325
    %v327 = vpop.xlane.xlu0 %326
    %v328 = vsel %vm148, %v262, 0.0
    %329 = vadd.xlane.f32.xlu0 %v328
    %v330 = vpop.xlane.xlu0 %329
    %v331 = vsel %vm148, %v263, 0.0
    %332 = vadd.xlane.f32.xlu0 %v331
    %v333 = vpop.xlane.xlu0 %332
    %v334 = vsel %vm148, %v264, 0.0
    %335 = vadd.xlane.f32.xlu0 %v334
    %v336 = vpop.xlane.xlu0 %335
    %v337 = vsel %vm148, %v265, 0.0
    %338 = vadd.xlane.f32.xlu0 %v337
    %v339 = vpop.xlane.xlu0 %338
    %v340 = vsel %vm148, %v266, 0.0
    %341 = vadd.xlane.f32.xlu0 %v340
    %v342 = vpop.xlane.xlu0 %341
    %v343 = vsel %vm148, %v267, 0.0
    %344 = vadd.xlane.f32.xlu0 %v343
    %v345 = vpop.xlane.xlu0 %344
    %v346 = vsel %vm148, %v268, 0.0
    %347 = vadd.xlane.f32.xlu0 %v346
    %v348 = vpop.xlane.xlu0 %347
    %v349 = vsel %vm148, %v269, 0.0
    %350 = vadd.xlane.f32.xlu0 %v349
    %v351 = vpop.xlane.xlu0 %350
    %v352 = vsel %vm148, %v270, 0.0
    %353 = vadd.xlane.f32.xlu0 %v352
    %v354 = vpop.xlane.xlu0 %353
    %v355 = vsel %vm148, %v271, 0.0
    %356 = vadd.xlane.f32.xlu0 %v355
    %v357 = vpop.xlane.xlu0 %356
    %v358 = vsel %vm148, %v272, 0.0
    %359 = vadd.xlane.f32.xlu0 %v358
    %v360 = vpop.xlane.xlu0 %359
    %v361 = vsel %vm148, %v273, 0.0
    %362 = vadd.xlane.f32.xlu0 %v361
    %v363 = vpop.xlane.xlu0 %362
    %v364 = vsel %vm148, %v274, 0.0
    %365 = vadd.xlane.f32.xlu0 %v364
    %v366 = vpop.xlane.xlu0 %365
    %v367 = vsel %vm148, %v275, 0.0
    %368 = vadd.xlane.f32.xlu0 %v367
    %v369 = vpop.xlane.xlu0 %368
    %v370 = vsel %vm148, %v276, 0.0
    %371 = vadd.xlane.f32.xlu0 %v370
    %v372 = vpop.xlane.xlu0 %371
    %v405 = vlaneseq
    %v406 = vand.u32 %v405, 127
    %v407 = vlaneseq
    %v408 = vshrl.u32 %v407, 7
    %v409 = vsub.s32 %v406, %v408
    %v410 = vrot.slane %v151, %v409
    %v411 = vadd.s32 %v406, 4294967288
    %v412 = vlaneseq
    %v413 = vshrl.u32 %v412, 7
    %v414 = vsub.s32 %v411, %v413
    %v415 = vrot.slane %v154, %v414
    %vm416 = vcmask 130112
    %v417 = vsel %vm416, %v415, %v410
    %v418 = vadd.s32 %v406, 4294967280
    %v419 = vlaneseq
    %v420 = vshrl.u32 %v419, 7
    %v421 = vsub.s32 %v418, %v420
    %v422 = vrot.slane %v157, %v421
    %vm423 = vcmask 195712
    %v424 = vsel %vm423, %v422, %v417
    %v425 = vadd.s32 %v406, 4294967272
    %v426 = vlaneseq
    %v427 = vshrl.u32 %v426, 7
    %v428 = vsub.s32 %v425, %v427
    %v429 = vrot.slane %v160, %v428
    %vm430 = vcmask 261312
    %v431 = vsel %vm430, %v429, %v424
    %v432 = vadd.s32 %v406, 4294967264
    %v433 = vlaneseq
    %v434 = vshrl.u32 %v433, 7
    %v435 = vsub.s32 %v432, %v434
    %v436 = vrot.slane %v163, %v435
    %vm437 = vcmask 326912
    %v438 = vsel %vm437, %v436, %v431
    %v439 = vadd.s32 %v406, 4294967256
    %v440 = vlaneseq
    %v441 = vshrl.u32 %v440, 7
    %v442 = vsub.s32 %v439, %v441
    %v443 = vrot.slane %v166, %v442
    %vm444 = vcmask 392512
    %v445 = vsel %vm444, %v443, %v438
    %v446 = vadd.s32 %v406, 4294967248
    %v447 = vlaneseq
    %v448 = vshrl.u32 %v447, 7
    %v449 = vsub.s32 %v446, %v448
    %v450 = vrot.slane %v169, %v449
    %vm451 = vcmask 458112
    %v452 = vsel %vm451, %v450, %v445
    %v453 = vadd.s32 %v406, 4294967240
    %v454 = vlaneseq
    %v455 = vshrl.u32 %v454, 7
    %v456 = vsub.s32 %v453, %v455
    %v457 = vrot.slane %v172, %v456
    %vm458 = vcmask 523712
    %v459 = vsel %vm458, %v457, %v452
    %v460 = vadd.s32 %v406, 4294967232
    %v461 = vlaneseq
    %v462 = vshrl.u32 %v461, 7
    %v463 = vsub.s32 %v460, %v462
    %v464 = vrot.slane %v175, %v463
    %vm465 = vcmask 589312
    %v466 = vsel %vm465, %v464, %v459
    %v467 = vadd.s32 %v406, 4294967224
    %v468 = vlaneseq
    %v469 = vshrl.u32 %v468, 7
    %v470 = vsub.s32 %v467, %v469
    %v471 = vrot.slane %v178, %v470
    %vm472 = vcmask 654912
    %v473 = vsel %vm472, %v471, %v466
    %v474 = vadd.s32 %v406, 4294967216
    %v475 = vlaneseq
    %v476 = vshrl.u32 %v475, 7
    %v477 = vsub.s32 %v474, %v476
    %v478 = vrot.slane %v181, %v477
    %vm479 = vcmask 720512
    %v480 = vsel %vm479, %v478, %v473
    %v481 = vadd.s32 %v406, 4294967208
    %v482 = vlaneseq
    %v483 = vshrl.u32 %v482, 7
    %v484 = vsub.s32 %v481, %v483
    %v485 = vrot.slane %v184, %v484
    %vm486 = vcmask 786112
    %v487 = vsel %vm486, %v485, %v480
    %v488 = vadd.s32 %v406, 4294967200
    %v489 = vlaneseq
    %v490 = vshrl.u32 %v489, 7
    %v491 = vsub.s32 %v488, %v490
    %v492 = vrot.slane %v187, %v491
    %vm493 = vcmask 851712
    %v494 = vsel %vm493, %v492, %v487
    %v495 = vadd.s32 %v406, 4294967192
    %v496 = vlaneseq
    %v497 = vshrl.u32 %v496, 7
    %v498 = vsub.s32 %v495, %v497
    %v499 = vrot.slane %v190, %v498
    %vm500 = vcmask 917312
    %v501 = vsel %vm500, %v499, %v494
    %v502 = vadd.s32 %v406, 4294967184
    %v503 = vlaneseq
    %v504 = vshrl.u32 %v503, 7
    %v505 = vsub.s32 %v502, %v504
    %v506 = vrot.slane %v193, %v505
    %vm507 = vcmask 982912
    %v508 = vsel %vm507, %v506, %v501
    %v509 = vadd.s32 %v406, 4294967176
    %v510 = vlaneseq
    %v511 = vshrl.u32 %v510, 7
    %v512 = vsub.s32 %v509, %v511
    %v513 = vrot.slane %v196, %v512
    %vm514 = vcmask 1048512
    %v515 = vsel %vm514, %v513, %v508
    %v516 = vlaneseq
    %v517 = vshrl.u32 %v516, 7
    %v518 = vsub.s32 %v406, %v517
    %v519 = vrot.slane %v199, %v518
    %v520 = vlaneseq
    %v521 = vshrl.u32 %v520, 7
    %v522 = vsub.s32 %v411, %v521
    %v523 = vrot.slane %v202, %v522
    %v524 = vsel %vm416, %v523, %v519
    %v525 = vlaneseq
    %v526 = vshrl.u32 %v525, 7
    %v527 = vsub.s32 %v418, %v526
    %v528 = vrot.slane %v205, %v527
    %v529 = vsel %vm423, %v528, %v524
    %v530 = vlaneseq
    %v531 = vshrl.u32 %v530, 7
    %v532 = vsub.s32 %v425, %v531
    %v533 = vrot.slane %v208, %v532
    %v534 = vsel %vm430, %v533, %v529
    %v535 = vlaneseq
    %v536 = vshrl.u32 %v535, 7
    %v537 = vsub.s32 %v432, %v536
    %v538 = vrot.slane %v211, %v537
    %v539 = vsel %vm437, %v538, %v534
    %v540 = vlaneseq
    %v541 = vshrl.u32 %v540, 7
    %v542 = vsub.s32 %v439, %v541
    %v543 = vrot.slane %v214, %v542
    %v544 = vsel %vm444, %v543, %v539
    %v545 = vlaneseq
    %v546 = vshrl.u32 %v545, 7
    %v547 = vsub.s32 %v446, %v546
    %v548 = vrot.slane %v217, %v547
    %v549 = vsel %vm451, %v548, %v544
    %v550 = vlaneseq
    %v551 = vshrl.u32 %v550, 7
    %v552 = vsub.s32 %v453, %v551
    %v553 = vrot.slane %v220, %v552
    %v554 = vsel %vm458, %v553, %v549
    %v555 = vlaneseq
    %v556 = vshrl.u32 %v555, 7
    %v557 = vsub.s32 %v460, %v556
    %v558 = vrot.slane %v223, %v557
    %v559 = vsel %vm465, %v558, %v554
    %v560 = vlaneseq
    %v561 = vshrl.u32 %v560, 7
    %v562 = vsub.s32 %v467, %v561
    %v563 = vrot.slane %v226, %v562
    %v564 = vsel %vm472, %v563, %v559
    %v565 = vlaneseq
    %v566 = vshrl.u32 %v565, 7
    %v567 = vsub.s32 %v474, %v566
    %v568 = vrot.slane %v229, %v567
    %v569 = vsel %vm479, %v568, %v564
    %v570 = vlaneseq
    %v571 = vshrl.u32 %v570, 7
    %v572 = vsub.s32 %v481, %v571
    %v573 = vrot.slane %v232, %v572
    %v574 = vsel %vm486, %v573, %v569
    %v575 = vlaneseq
    %v576 = vshrl.u32 %v575, 7
    %v577 = vsub.s32 %v488, %v576
    %v578 = vrot.slane %v235, %v577
    %v579 = vsel %vm493, %v578, %v574
    %v580 = vlaneseq
    %v581 = vshrl.u32 %v580, 7
    %v582 = vsub.s32 %v495, %v581
    %v583 = vrot.slane %v238, %v582
    %v584 = vsel %vm500, %v583, %v579
    %v585 = vlaneseq
    %v586 = vshrl.u32 %v585, 7
    %v587 = vsub.s32 %v502, %v586
    %v588 = vrot.slane %v241, %v587
    %v589 = vsel %vm507, %v588, %v584
    %v590 = vlaneseq
    %v591 = vshrl.u32 %v590, 7
    %v592 = vsub.s32 %v509, %v591
    %v593 = vrot.slane %v244, %v592
    %v594 = vsel %vm514, %v593, %v589
    %vm595 = vcmask 1041409
    %v596 = vsel %vm595, %v594, %v515
    %598 = vst [vmem:[#allocation2] sm:$0x3] %v596
    %v631 = vlaneseq
    %v632 = vshrl.u32 %v631, 7
    %v633 = vsub.s32 %v406, %v632
    %v634 = vrot.slane %v279, %v633
    %v635 = vlaneseq
    %v636 = vshrl.u32 %v635, 7
    %v637 = vsub.s32 %v411, %v636
    %v638 = vrot.slane %v282, %v637
    %v639 = vsel %vm416, %v638, %v634
    %v640 = vlaneseq
    %v641 = vshrl.u32 %v640, 7
    %v642 = vsub.s32 %v418, %v641
    %v643 = vrot.slane %v285, %v642
    %v644 = vsel %vm423, %v643, %v639
    %v645 = vlaneseq
    %v646 = vshrl.u32 %v645, 7
    %v647 = vsub.s32 %v425, %v646
    %v648 = vrot.slane %v288, %v647
    %v649 = vsel %vm430, %v648, %v644
    %v650 = vlaneseq
    %v651 = vshrl.u32 %v650, 7
    %v652 = vsub.s32 %v432, %v651
    %v653 = vrot.slane %v291, %v652
    %v654 = vsel %vm437, %v653, %v649
    %v655 = vlaneseq
    %v656 = vshrl.u32 %v655, 7
    %v657 = vsub.s32 %v439, %v656
    %v658 = vrot.slane %v294, %v657
    %v659 = vsel %vm444, %v658, %v654
    %v660 = vlaneseq
    %v661 = vshrl.u32 %v660, 7
    %v662 = vsub.s32 %v446, %v661
    %v663 = vrot.slane %v297, %v662
    %v664 = vsel %vm451, %v663, %v659
    %v665 = vlaneseq
    %v666 = vshrl.u32 %v665, 7
    %v667 = vsub.s32 %v453, %v666
    %v668 = vrot.slane %v300, %v667
    %v669 = vsel %vm458, %v668, %v664
    %v670 = vlaneseq
    %v671 = vshrl.u32 %v670, 7
    %v672 = vsub.s32 %v460, %v671
    %v673 = vrot.slane %v303, %v672
    %v674 = vsel %vm465, %v673, %v669
    %v675 = vlaneseq
    %v676 = vshrl.u32 %v675, 7
    %v677 = vsub.s32 %v467, %v676
    %v678 = vrot.slane %v306, %v677
    %v679 = vsel %vm472, %v678, %v674
    %v680 = vlaneseq
    %v681 = vshrl.u32 %v680, 7
    %v682 = vsub.s32 %v474, %v681
    %v683 = vrot.slane %v309, %v682
    %v684 = vsel %vm479, %v683, %v679
    %v685 = vlaneseq
    %v686 = vshrl.u32 %v685, 7
    %v687 = vsub.s32 %v481, %v686
    %v688 = vrot.slane %v312, %v687
    %v689 = vsel %vm486, %v688, %v684
    %v690 = vlaneseq
    %v691 = vshrl.u32 %v690, 7
    %v692 = vsub.s32 %v488, %v691
    %v693 = vrot.slane %v315, %v692
    %v694 = vsel %vm493, %v693, %v689
    %v695 = vlaneseq
    %v696 = vshrl.u32 %v695, 7
    %v697 = vsub.s32 %v495, %v696
    %v698 = vrot.slane %v318, %v697
    %v699 = vsel %vm500, %v698, %v694
    %v700 = vlaneseq
    %v701 = vshrl.u32 %v700, 7
    %v702 = vsub.s32 %v502, %v701
    %v703 = vrot.slane %v321, %v702
    %v704 = vsel %vm507, %v703, %v699
    %v705 = vlaneseq
    %v706 = vshrl.u32 %v705, 7
    %v707 = vsub.s32 %v509, %v706
    %v708 = vrot.slane %v324, %v707
    %v709 = vsel %vm514, %v708, %v704
    %v710 = vlaneseq
    %v711 = vshrl.u32 %v710, 7
    %v712 = vsub.s32 %v406, %v711
    %v713 = vrot.slane %v327, %v712
    %v714 = vlaneseq
    %v715 = vshrl.u32 %v714, 7
    %v716 = vsub.s32 %v411, %v715
    %v717 = vrot.slane %v330, %v716
    %v718 = vsel %vm416, %v717, %v713
    %v719 = vlaneseq
    %v720 = vshrl.u32 %v719, 7
    %v721 = vsub.s32 %v418, %v720
    %v722 = vrot.slane %v333, %v721
    %v723 = vsel %vm423, %v722, %v718
    %v724 = vlaneseq
    %v725 = vshrl.u32 %v724, 7
    %v726 = vsub.s32 %v425, %v725
    %v727 = vrot.slane %v336, %v726
    %v728 = vsel %vm430, %v727, %v723
    %v729 = vlaneseq
    %v730 = vshrl.u32 %v729, 7
    %v731 = vsub.s32 %v432, %v730
    %v732 = vrot.slane %v339, %v731
    %v733 = vsel %vm437, %v732, %v728
    %v734 = vlaneseq
    %v735 = vshrl.u32 %v734, 7
    %v736 = vsub.s32 %v439, %v735
    %v737 = vrot.slane %v342, %v736
    %v738 = vsel %vm444, %v737, %v733
    %v739 = vlaneseq
    %v740 = vshrl.u32 %v739, 7
    %v741 = vsub.s32 %v446, %v740
    %v742 = vrot.slane %v345, %v741
    %v743 = vsel %vm451, %v742, %v738
    %v744 = vlaneseq
    %v745 = vshrl.u32 %v744, 7
    %v746 = vsub.s32 %v453, %v745
    %v747 = vrot.slane %v348, %v746
    %v748 = vsel %vm458, %v747, %v743
    %v749 = vlaneseq
    %v750 = vshrl.u32 %v749, 7
    %v751 = vsub.s32 %v460, %v750
    %v752 = vrot.slane %v351, %v751
    %v753 = vsel %vm465, %v752, %v748
    %v754 = vlaneseq
    %v755 = vshrl.u32 %v754, 7
    %v756 = vsub.s32 %v467, %v755
    %v757 = vrot.slane %v354, %v756
    %v758 = vsel %vm472, %v757, %v753
    %v759 = vlaneseq
    %v760 = vshrl.u32 %v759, 7
    %v761 = vsub.s32 %v474, %v760
    %v762 = vrot.slane %v357, %v761
    %v763 = vsel %vm479, %v762, %v758
    %v764 = vlaneseq
    %v765 = vshrl.u32 %v764, 7
    %v766 = vsub.s32 %v481, %v765
    %v767 = vrot.slane %v360, %v766
    %v768 = vsel %vm486, %v767, %v763
    %v769 = vlaneseq
    %v770 = vshrl.u32 %v769, 7
    %v771 = vsub.s32 %v488, %v770
    %v772 = vrot.slane %v363, %v771
    %v773 = vsel %vm493, %v772, %v768
    %v774 = vlaneseq
    %v775 = vshrl.u32 %v774, 7
    %v776 = vsub.s32 %v495, %v775
    %v777 = vrot.slane %v366, %v776
    %v778 = vsel %vm500, %v777, %v773
    %v779 = vlaneseq
    %v780 = vshrl.u32 %v779, 7
    %v781 = vsub.s32 %v502, %v780
    %v782 = vrot.slane %v369, %v781
    %v783 = vsel %vm507, %v782, %v778
    %v784 = vlaneseq
    %v785 = vshrl.u32 %v784, 7
    %v786 = vsub.s32 %v509, %v785
    %v787 = vrot.slane %v372, %v786
    %v788 = vsel %vm514, %v787, %v783
    %v789 = vsel %vm595, %v788, %v709
    %791 = vst [vmem:[#allocation4] sm:$0x3] %v789
    // Predicated region
    $region14: #{tpu_custom_call.1} parent=1 // pred_check
      _
    $region15: #{tpu_custom_call.1} parent=1 // pred_check_branch
      %793 = sbr.rel (0) target = $region17
    $region16: #{tpu_custom_call.1} parent=1 // pred_region
      %s795 = ssub.s32 32, 32
      %796 = vsyncadd [#allocation3], %s795
      %s798 = sshll.u32 [#allocation2], 4
      %s799 = int_to_ptr.vmem [resolvable:$true] %s798
      %801 = dma.vmem_to_hbm [thread:$0]  %s799, 32, %s3, [#allocation3]
    $region17: #{tpu_custom_call.1} parent=1 // pred_fallthru
      _
    // Predicated region
    $region18: #{tpu_custom_call.1} parent=1 // pred_check
      _
    $region19: #{tpu_custom_call.1} parent=1 // pred_check_branch
      %803 = sbr.rel (0) target = $region21
    $region20: #{tpu_custom_call.1} parent=1 // pred_region
      %s805 = ssub.s32 32, 32
      %806 = vsyncadd [#allocation5], %s805
      %s808 = sshll.u32 [#allocation4], 4
      %s809 = int_to_ptr.vmem [resolvable:$true] %s808
      %811 = dma.vmem_to_hbm [thread:$0]  %s809, 32, %s4, [#allocation5]
    $region21: #{tpu_custom_call.1} parent=1 // pred_fallthru
      _
    // Predicated region
    $region22: #{tpu_custom_call.1} parent=1 // pred_check
      _
    $region23: #{tpu_custom_call.1} parent=1 // pred_check_branch
      %813 = sbr.rel (0) target = $region25
    $region24: #{tpu_custom_call.1} parent=1 // pred_region
      %814 = dma.done [#allocation3], 32
    $region25: #{tpu_custom_call.1} parent=1 // pred_fallthru
      _
    // Predicated region
    $region26: #{tpu_custom_call.1} parent=1 // pred_check
      _
    $region27: #{tpu_custom_call.1} parent=1 // pred_check_branch
      %816 = sbr.rel (0) target = $region29
    $region28: #{tpu_custom_call.1} parent=1 // pred_region
      %817 = dma.done [#allocation5], 32
    $region29: #{tpu_custom_call.1} parent=1 // pred_fallthru
      _
    %818 = vsyncpa [#allocation3], 1
    %819 = vsyncpa [#allocation5], 1

</llo_original>
